<compile_context>
chip_gen: v5e
topology: v5e:2x2
jax: 0.10.0
libtpu: 0.0.40
codegen_flags: <defaults>
</compile_context>

<pallas_src>
import jax
import jax.numpy as jnp
from jax.experimental import pallas as pl
from jax.experimental.pallas import tpu as pltpu


def numerical_mlp_kernel(x_ref, w0_ref, b0_ref, w1_ref, b1_ref,
                         w2_ref, b2_ref, wm_ref, bm_ref, o_ref):
    eps = 1e-12
    x = x_ref[...]                                     # (F, tile_m) f32

    # Feature construction: sublane-axis stack (lane-dense).  The '1 - x'
    # block is already folded into w0/b0 by the wrapper.  Logs go to the EUP
    # slot, the subtract rides the VPU — filler under MXU/DMA slack.
    feats = jnp.concatenate(
        [x, jnp.log(x + eps), jnp.log(1.0 - x + eps)], axis=0)   # (3F, tile_m)

    h = jnp.dot(w0_ref[...], feats, preferred_element_type=jnp.float32) + b0_ref[...]
    h = jnp.maximum(h, 0.0)
    h = jnp.maximum(jnp.dot(w1_ref[...], h, preferred_element_type=jnp.float32)
                    + b1_ref[...], 0.0)
    h = jnp.maximum(jnp.dot(w2_ref[...], h, preferred_element_type=jnp.float32)
                    + b2_ref[...], 0.0)
    o_ref[...] = (jnp.dot(wm_ref[...], h, preferred_element_type=jnp.float32)
                  + bm_ref[...])


def _round_up(v, m):
    return ((v + m - 1) // m) * m


def numerical_mlp(x, params, *, tile_m=8192):
    """x: (..., in_features) float32 in (0, 1). Returns (..., out_features)."""
    w0, b0, w1, b1, w2, b2, wm, bm = params
    in_features = x.shape[-1]
    hidden = w1.shape[0]
    out_features = wm.shape[-1]
    lead = x.shape[:-1]
    F = in_features

    # Fold the '(1 - x)' feature block into layer 0 (exact reformulation):
    #   x@W0[:F] + (1-x)@W0[F:2F] = x@(W0[:F]-W0[F:2F]) + colsum(W0[F:2F])
    w0_folded = jnp.concatenate(
        [w0[:F] - w0[F:2 * F], w0[2 * F:3 * F], w0[3 * F:4 * F]], axis=0)   # (3F, H)
    b0_folded = b0 + jnp.sum(w0[F:2 * F], axis=0, keepdims=True)            # (1, H)

    # Transposed (features-on-sublanes, M-on-lanes) parameter layout.
    w0t = w0_folded.T.astype(jnp.float32)        # (H, 3F)
    w1t = w1.T.astype(jnp.float32)               # (H, H)
    w2t = w2.T.astype(jnp.float32)               # (H, H)
    wmt = wm.T.astype(jnp.float32)               # (out, H)
    b0t = b0_folded.T.astype(jnp.float32)        # (H, 1)
    b1t = b1.T.astype(jnp.float32)               # (H, 1)
    b2t = b2.T.astype(jnp.float32)               # (H, 1)
    bmt = bm.T.astype(jnp.float32)               # (out, 1)

    x2d = x.reshape(-1, in_features).astype(jnp.float32)
    M = x2d.shape[0]

    # M sits on the lane axis: tile_m must be a multiple of 128.  Guarantee
    # >= 4 grid steps when there is enough work so v7x's second TensorCore
    # gets a share and the pipeline can hide input/output DMA.
    tile_m = max(128, _round_up(min(tile_m, M), 128))
    target_steps = 4
    if M > target_steps * 128:
        tile_m = min(tile_m, max(128, _round_up(pl.cdiv(M, target_steps), 128)))
    m_pad = pl.cdiv(M, tile_m) * tile_m

    if m_pad != M:
        # pad with 0.5 so log(m) / log(1-m) stay benign on dead rows
        x2d = jnp.pad(x2d, ((0, m_pad - M), (0, 0)), constant_values=0.5)
    xt = x2d.T                                   # (F, m_pad), cheap XLA transpose
    grid = (m_pad // tile_m,)

    tparams = (w0t, b0t, w1t, b1t, w2t, b2t, wmt, bmt)
    param_bytes = 4 * sum(int(p.size) for p in tparams)
    # Lane axis is dense (tile_m % 128 == 0) and every sublane extent is a
    # multiple of 8, so this footprint is essentially exact.
    tile_bytes = 4 * tile_m * (2 * in_features          # x double buffer
                               + 2 * out_features       # out double buffer
                               + 3 * in_features        # feats
                               + 3 * hidden)            # live hidden activations
    vmem_limit = int(min(48 << 20,                       # < v7x 64 MiB physical
                         max(8 << 20, 2 * (tile_bytes + 2 * param_bytes))))

    cost = pl.CostEstimate(
        flops=2 * M * (3 * in_features * hidden
                       + 2 * hidden * hidden
                       + hidden * out_features),
        transcendentals=2 * M * in_features,             # two logs per element
        bytes_accessed=4 * M * (in_features + out_features) + param_bytes,
    )

    const = lambda i: (0, 0)   # weights/biases stay VMEM-resident across tiles
    out_t = pl.pallas_call(
        numerical_mlp_kernel,
        out_shape=jax.ShapeDtypeStruct((out_features, m_pad), jnp.float32),
        grid=grid,
        in_specs=[
            pl.BlockSpec((in_features, tile_m), lambda i: (0, i)),   # x tile
            pl.BlockSpec(w0t.shape, const), pl.BlockSpec(b0t.shape, const),
            pl.BlockSpec(w1t.shape, const), pl.BlockSpec(b1t.shape, const),
            pl.BlockSpec(w2t.shape, const), pl.BlockSpec(b2t.shape, const),
            pl.BlockSpec(wmt.shape, const), pl.BlockSpec(bmt.shape, const),
        ],
        out_specs=pl.BlockSpec((out_features, tile_m), lambda i: (0, i)),
        compiler_params=pltpu.CompilerParams(
            dimension_semantics=("parallel",),           # lets v7x use both TCs
            vmem_limit_bytes=vmem_limit),
        cost_estimate=cost,
    )(xt, *tparams)

    return out_t[:, :M].T.reshape(*lead, out_features)


def init_params(key, in_features, hidden_size, out_features):
    """Deterministic nn.Linear-style init; weights stored as (in, out)."""
    def linear(k, fan_in, fan_out):
        kw, kb = jax.random.split(k)
        bound = 1.0 / jnp.sqrt(fan_in)
        w = jax.random.uniform(kw, (fan_in, fan_out), jnp.float32, -bound, bound)
        b = jax.random.uniform(kb, (1, fan_out), jnp.float32, -bound, bound)
        return w, b

    k0, k1, k2, k3 = jax.random.split(key, 4)
    w0, b0 = linear(k0, in_features * 4, hidden_size)
    w1, b1 = linear(k1, hidden_size, hidden_size)
    w2, b2 = linear(k2, hidden_size, hidden_size)
    wm, bm = linear(k3, hidden_size, out_features)
    return (w0, b0, w1, b1, w2, b2, wm, bm)


def numerical_mlp_reference(x, params):
    """Pure-JAX reference mirroring the PyTorch forward (eval mode)."""
    w0, b0, w1, b1, w2, b2, wm, bm = params
    eps = 1e-12
    feats = jnp.concatenate(
        [x, 1.0 - x, jnp.log(x + eps), jnp.log(1.0 - x + eps)], axis=-1)
    h = jax.nn.relu(feats @ w0 + b0[0])
    h = jax.nn.relu(h @ w1 + b1[0])
    h = jax.nn.relu(h @ w2 + b2[0])
    return h @ wm + bm[0]


if __name__ == "__main__":
    batch, seq = 2, 8
    in_features, hidden_size, out_features = 8, 32, 16

    key = jax.random.PRNGKey(0)
    kx, kp = jax.random.split(key)
    # metric values in (0, 1), as implied by 1 - m and log(m + eps)
    x = jax.random.uniform(kx, (batch, seq, in_features), jnp.float32,
                           minval=0.01, maxval=0.99)
    params = init_params(kp, in_features, hidden_size, out_features)

    out = numerical_mlp(x, params)
    out = jax.block_until_ready(out)

    ref = numerical_mlp_reference(x, params)
    assert out.shape == (batch, seq, out_features)
    assert jnp.allclose(out, ref, atol=1e-4, rtol=1e-4)

    # exercise the multi-step grid + tail-padding path (M not a tile multiple)
    x_big = jax.random.uniform(jax.random.PRNGKey(1), (3, 700, in_features),
                               jnp.float32, minval=0.01, maxval=0.99)
    out_big = jax.block_until_ready(numerical_mlp(x_big, params, tile_m=512))
    ref_big = numerical_mlp_reference(x_big, params)
    assert jnp.allclose(out_big, ref_big, atol=1e-4, rtol=1e-4)

    print("KERNEL_OK")
</pallas_src>

<mosaic_0001>
module attributes {stable_mosaic.version = 11 : i64} {
  func.func @numerical_mlp_kernel(%arg0: i32, %arg1: memref<8x128xf32, #tpu.memory_space<vmem>>, %arg2: memref<32x24xf32, #tpu.memory_space<vmem>>, %arg3: memref<32x1xf32, #tpu.memory_space<vmem>>, %arg4: memref<32x32xf32, #tpu.memory_space<vmem>>, %arg5: memref<32x1xf32, #tpu.memory_space<vmem>>, %arg6: memref<32x32xf32, #tpu.memory_space<vmem>>, %arg7: memref<32x1xf32, #tpu.memory_space<vmem>>, %arg8: memref<16x32xf32, #tpu.memory_space<vmem>>, %arg9: memref<16x1xf32, #tpu.memory_space<vmem>>, %arg10: memref<16x128xf32, #tpu.memory_space<vmem>>) attributes {dimension_semantics = [#tpu.dimension_semantics<parallel>], iteration_bounds = array<i64: 1>, scalar_prefetch = 0 : i64, scratch_operands = 0 : i64, tpu.core_type = #tpu.core_type<tc>, window_params = [{transform_indices = @transform_0, window_bounds = array<i64: 8, 128>}, {pipeline_mode = #tpu.pipeline_mode<synchronous>, transform_indices = @transform_1, window_bounds = array<i64: 32, 24>}, {pipeline_mode = #tpu.pipeline_mode<synchronous>, transform_indices = @transform_2, window_bounds = array<i64: 32, 1>}, {pipeline_mode = #tpu.pipeline_mode<synchronous>, transform_indices = @transform_3, window_bounds = array<i64: 32, 32>}, {pipeline_mode = #tpu.pipeline_mode<synchronous>, transform_indices = @transform_4, window_bounds = array<i64: 32, 1>}, {pipeline_mode = #tpu.pipeline_mode<synchronous>, transform_indices = @transform_5, window_bounds = array<i64: 32, 32>}, {pipeline_mode = #tpu.pipeline_mode<synchronous>, transform_indices = @transform_6, window_bounds = array<i64: 32, 1>}, {pipeline_mode = #tpu.pipeline_mode<synchronous>, transform_indices = @transform_7, window_bounds = array<i64: 16, 32>}, {pipeline_mode = #tpu.pipeline_mode<synchronous>, transform_indices = @transform_8, window_bounds = array<i64: 16, 1>}, {transform_indices = @transform_9, window_bounds = array<i64: 16, 128>}]} {
    %c0 = arith.constant 0 : index
    %c0_0 = arith.constant 0 : index
    %0 = vector.load %arg1[%c0, %c0_0] : memref<8x128xf32, #tpu.memory_space<vmem>>, vector<8x128xf32>
    %cst = arith.constant 9.99999996E-13 : f32
    %1 = vector.broadcast %cst : f32 to vector<8x128xf32>
    %2 = arith.addf %0, %1 : vector<8x128xf32>
    %3 = math.log %2 : vector<8x128xf32>
    %cst_1 = arith.constant 1.000000e+00 : f32
    %4 = vector.broadcast %cst_1 : f32 to vector<8x128xf32>
    %5 = arith.subf %4, %0 : vector<8x128xf32>
    %cst_2 = arith.constant 9.99999996E-13 : f32
    %6 = vector.broadcast %cst_2 : f32 to vector<8x128xf32>
    %7 = arith.addf %5, %6 : vector<8x128xf32>
    %8 = math.log %7 : vector<8x128xf32>
    %9 = tpu.concatenate %0, %3, %8 in 0 : vector<8x128xf32>, vector<8x128xf32>, vector<8x128xf32> -> vector<24x128xf32>
    %c0_3 = arith.constant 0 : index
    %c0_4 = arith.constant 0 : index
    %10 = vector.load %arg2[%c0_3, %c0_4] : memref<32x24xf32, #tpu.memory_space<vmem>>, vector<32x24xf32>
    %cst_5 = arith.constant dense<0.000000e+00> : vector<32x128xf32>
    %11 = tpu.matmul %10, %9, %cst_5 {dimension_numbers = #tpu.dot_dimension_numbers<[1], [0], [0], [1], [0, 0, 1, 1], [], []>} : vector<32x24xf32>, vector<24x128xf32>, vector<32x128xf32> -> vector<32x128xf32>
    %c0_6 = arith.constant 0 : index
    %c0_7 = arith.constant 0 : index
    %12 = vector.load %arg3[%c0_6, %c0_7] : memref<32x1xf32, #tpu.memory_space<vmem>>, vector<32x1xf32>
    %13 = vector.broadcast %12 : vector<32x1xf32> to vector<32x128xf32>
    %14 = arith.addf %11, %13 : vector<32x128xf32>
    %cst_8 = arith.constant 0.000000e+00 : f32
    %15 = vector.broadcast %cst_8 : f32 to vector<32x128xf32>
    %16 = arith.maximumf %14, %15 : vector<32x128xf32>
    %c0_9 = arith.constant 0 : index
    %c0_10 = arith.constant 0 : index
    %17 = vector.load %arg4[%c0_9, %c0_10] : memref<32x32xf32, #tpu.memory_space<vmem>>, vector<32x32xf32>
    %cst_11 = arith.constant dense<0.000000e+00> : vector<32x128xf32>
    %18 = tpu.matmul %17, %16, %cst_11 {dimension_numbers = #tpu.dot_dimension_numbers<[1], [0], [0], [1], [0, 0, 1, 1], [], []>} : vector<32x32xf32>, vector<32x128xf32>, vector<32x128xf32> -> vector<32x128xf32>
    %c0_12 = arith.constant 0 : index
    %c0_13 = arith.constant 0 : index
    %19 = vector.load %arg5[%c0_12, %c0_13] : memref<32x1xf32, #tpu.memory_space<vmem>>, vector<32x1xf32>
    %20 = vector.broadcast %19 : vector<32x1xf32> to vector<32x128xf32>
    %21 = arith.addf %18, %20 : vector<32x128xf32>
    %cst_14 = arith.constant 0.000000e+00 : f32
    %22 = vector.broadcast %cst_14 : f32 to vector<32x128xf32>
    %23 = arith.maximumf %21, %22 : vector<32x128xf32>
    %c0_15 = arith.constant 0 : index
    %c0_16 = arith.constant 0 : index
    %24 = vector.load %arg6[%c0_15, %c0_16] : memref<32x32xf32, #tpu.memory_space<vmem>>, vector<32x32xf32>
    %cst_17 = arith.constant dense<0.000000e+00> : vector<32x128xf32>
    %25 = tpu.matmul %24, %23, %cst_17 {dimension_numbers = #tpu.dot_dimension_numbers<[1], [0], [0], [1], [0, 0, 1, 1], [], []>} : vector<32x32xf32>, vector<32x128xf32>, vector<32x128xf32> -> vector<32x128xf32>
    %c0_18 = arith.constant 0 : index
    %c0_19 = arith.constant 0 : index
    %26 = vector.load %arg7[%c0_18, %c0_19] : memref<32x1xf32, #tpu.memory_space<vmem>>, vector<32x1xf32>
    %27 = vector.broadcast %26 : vector<32x1xf32> to vector<32x128xf32>
    %28 = arith.addf %25, %27 : vector<32x128xf32>
    %cst_20 = arith.constant 0.000000e+00 : f32
    %29 = vector.broadcast %cst_20 : f32 to vector<32x128xf32>
    %30 = arith.maximumf %28, %29 : vector<32x128xf32>
    %c0_21 = arith.constant 0 : index
    %c0_22 = arith.constant 0 : index
    %31 = vector.load %arg8[%c0_21, %c0_22] : memref<16x32xf32, #tpu.memory_space<vmem>>, vector<16x32xf32>
    %cst_23 = arith.constant dense<0.000000e+00> : vector<16x128xf32>
    %32 = tpu.matmul %31, %30, %cst_23 {dimension_numbers = #tpu.dot_dimension_numbers<[1], [0], [0], [1], [0, 0, 1, 1], [], []>} : vector<16x32xf32>, vector<32x128xf32>, vector<16x128xf32> -> vector<16x128xf32>
    %c0_24 = arith.constant 0 : index
    %c0_25 = arith.constant 0 : index
    %33 = vector.load %arg9[%c0_24, %c0_25] : memref<16x1xf32, #tpu.memory_space<vmem>>, vector<16x1xf32>
    %34 = vector.broadcast %33 : vector<16x1xf32> to vector<16x128xf32>
    %35 = arith.addf %32, %34 : vector<16x128xf32>
    %c0_26 = arith.constant 0 : index
    %c0_27 = arith.constant 0 : index
    %36 = vector.load %arg10[%c0_26, %c0_27] : memref<16x128xf32, #tpu.memory_space<vmem>>, vector<16x128xf32>
    tpu.vector_store %arg10[%c0_26, %c0_27], %35 {strides = array<i32>} : memref<16x128xf32, #tpu.memory_space<vmem>>, vector<16x128xf32>,
    return
  }
  func.func @transform_0(%arg0: i32) -> (i32, i32) {
    %c0_i32 = arith.constant 0 : i32
    %c0_i32_0 = arith.constant 0 : i32
    return %c0_i32, %arg0 : i32, i32
  }
  func.func @transform_1(%arg0: i32) -> (i32, i32) {
    %c0_i32 = arith.constant 0 : i32
    %c0_i32_0 = arith.constant 0 : i32
    %c0_i32_1 = arith.constant 0 : i32
    return %c0_i32, %c0_i32_0 : i32, i32
  }
  func.func @transform_2(%arg0: i32) -> (i32, i32) {
    %c0_i32 = arith.constant 0 : i32
    %c0_i32_0 = arith.constant 0 : i32
    %c0_i32_1 = arith.constant 0 : i32
    return %c0_i32, %c0_i32_0 : i32, i32
  }
  func.func @transform_3(%arg0: i32) -> (i32, i32) {
    %c0_i32 = arith.constant 0 : i32
    %c0_i32_0 = arith.constant 0 : i32
    %c0_i32_1 = arith.constant 0 : i32
    return %c0_i32, %c0_i32_0 : i32, i32
  }
  func.func @transform_4(%arg0: i32) -> (i32, i32) {
    %c0_i32 = arith.constant 0 : i32
    %c0_i32_0 = arith.constant 0 : i32
    %c0_i32_1 = arith.constant 0 : i32
    return %c0_i32, %c0_i32_0 : i32, i32
  }
  func.func @transform_5(%arg0: i32) -> (i32, i32) {
    %c0_i32 = arith.constant 0 : i32
    %c0_i32_0 = arith.constant 0 : i32
    %c0_i32_1 = arith.constant 0 : i32
    return %c0_i32, %c0_i32_0 : i32, i32
  }
  func.func @transform_6(%arg0: i32) -> (i32, i32) {
    %c0_i32 = arith.constant 0 : i32
    %c0_i32_0 = arith.constant 0 : i32
    %c0_i32_1 = arith.constant 0 : i32
    return %c0_i32, %c0_i32_0 : i32, i32
  }
  func.func @transform_7(%arg0: i32) -> (i32, i32) {
    %c0_i32 = arith.constant 0 : i32
    %c0_i32_0 = arith.constant 0 : i32
    %c0_i32_1 = arith.constant 0 : i32
    return %c0_i32, %c0_i32_0 : i32, i32
  }
  func.func @transform_8(%arg0: i32) -> (i32, i32) {
    %c0_i32 = arith.constant 0 : i32
    %c0_i32_0 = arith.constant 0 : i32
    %c0_i32_1 = arith.constant 0 : i32
    return %c0_i32, %c0_i32_0 : i32, i32
  }
  func.func @transform_9(%arg0: i32) -> (i32, i32) {
    %c0_i32 = arith.constant 0 : i32
    %c0_i32_0 = arith.constant 0 : i32
    return %c0_i32, %arg0 : i32, i32
  }
}

</mosaic_0001>

<llo_original>
// kernel: tpu_custom_call.1
$region0: #{tpu_custom_call.1}
  #allocation0 [shape = 'u32[]', space=smem, size = 0x4, offset = 0x4, fixed_abs, tag = 'smem constant byte address 0x4 - core index']
  #allocation1 [shape = 'u32[72,128]{1,0:T(1,128)}', space=vmem, size = 0x9000, scoped, tag = 'internal scratch']
  %s0 = inlined_call_operand.vmem [shape: f32[8,128], index: 0, kind: input, shape index: {}]
  %s1 = inlined_call_operand.vmem [shape: f32[32,24], index: 1, kind: input, shape index: {}]
  %s2 = inlined_call_operand.vmem [shape: f32[32,1], index: 2, kind: input, shape index: {}]
  %s3 = inlined_call_operand.vmem [shape: f32[32,32], index: 3, kind: input, shape index: {}]
  %s4 = inlined_call_operand.vmem [shape: f32[32,1], index: 4, kind: input, shape index: {}]
  %s5 = inlined_call_operand.vmem [shape: f32[32,32], index: 5, kind: input, shape index: {}]
  %s6 = inlined_call_operand.vmem [shape: f32[32,1], index: 6, kind: input, shape index: {}]
  %s7 = inlined_call_operand.vmem [shape: f32[16,32], index: 7, kind: input, shape index: {}]
  %s8 = inlined_call_operand.vmem [shape: f32[16,1], index: 8, kind: input, shape index: {}]
  %s9 = inlined_call_operand.hbm [shape: f32[16,128], index: 9, kind: output, shape index: {}]
  %s10 = sld [smem:[#allocation0]]
  $region46: #{tpu_custom_call.1} parent=0
    _
  %s12 = ssub.s32 1, %s10
  %s13 = scalar_select 0, %s12, %s10
  $region1: #{tpu_custom_call.1} parent=0
    #allocation2 [shape = 'u8[8192]{0}', space=vmem, size = 0x2000, scoped, tag = 'output window, operand 0, single buffered']
    #allocation3 [shape = 's32[1]{0}', space=sflag, size = 0x4, scoped, tag = 'scoped memory for tpu_custom_call.1']
    %14 = vsyncpa [#allocation3], 0
    // Predicated region
    $region2: #{tpu_custom_call.1} parent=1 // pred_check
      _
    $region3: #{tpu_custom_call.1} parent=1 // pred_check_branch
      %16 = sbr.rel (0) target = $region5
    $region4: #{tpu_custom_call.1} parent=1 // pred_region
      _
    $region5: #{tpu_custom_call.1} parent=1 // pred_fallthru
      _
    // Predicated region
    $region6: #{tpu_custom_call.1} parent=1 // pred_check
      _
    $region7: #{tpu_custom_call.1} parent=1 // pred_check_branch
      %18 = sbr.rel (0) target = $region9
    $region8: #{tpu_custom_call.1} parent=1 // pred_region
      _
    $region9: #{tpu_custom_call.1} parent=1 // pred_fallthru
      _
    // Predicated region
    $region10: #{tpu_custom_call.1} parent=1 // pred_check
      _
    $region11: #{tpu_custom_call.1} parent=1 // pred_check_branch
      %20 = sbr.rel (0) target = $region13
    $region12: #{tpu_custom_call.1} parent=1 // pred_region
      _
    $region13: #{tpu_custom_call.1} parent=1 // pred_fallthru
      _
    // Predicated region
    $region14: #{tpu_custom_call.1} parent=1 // pred_check
      _
    $region15: #{tpu_custom_call.1} parent=1 // pred_check_branch
      %22 = sbr.rel (0) target = $region17
    $region16: #{tpu_custom_call.1} parent=1 // pred_region
      _
    $region17: #{tpu_custom_call.1} parent=1 // pred_fallthru
      _
    // Predicated region
    $region18: #{tpu_custom_call.1} parent=1 // pred_check
      _
    $region19: #{tpu_custom_call.1} parent=1 // pred_check_branch
      %24 = sbr.rel (0) target = $region21
    $region20: #{tpu_custom_call.1} parent=1 // pred_region
      _
    $region21: #{tpu_custom_call.1} parent=1 // pred_fallthru
      _
    // Predicated region
    $region22: #{tpu_custom_call.1} parent=1 // pred_check
      _
    $region23: #{tpu_custom_call.1} parent=1 // pred_check_branch
      %26 = sbr.rel (0) target = $region25
    $region24: #{tpu_custom_call.1} parent=1 // pred_region
      _
    $region25: #{tpu_custom_call.1} parent=1 // pred_fallthru
      _
    // Predicated region
    $region26: #{tpu_custom_call.1} parent=1 // pred_check
      _
    $region27: #{tpu_custom_call.1} parent=1 // pred_check_branch
      %28 = sbr.rel (0) target = $region29
    $region28: #{tpu_custom_call.1} parent=1 // pred_region
      _
    $region29: #{tpu_custom_call.1} parent=1 // pred_fallthru
      _
    // Predicated region
    $region30: #{tpu_custom_call.1} parent=1 // pred_check
      _
    $region31: #{tpu_custom_call.1} parent=1 // pred_check_branch
      %30 = sbr.rel (0) target = $region33
    $region32: #{tpu_custom_call.1} parent=1 // pred_region
      _
    $region33: #{tpu_custom_call.1} parent=1 // pred_fallthru
      _
    // Predicated region
    $region34: #{tpu_custom_call.1} parent=1 // pred_check
      _
    $region35: #{tpu_custom_call.1} parent=1 // pred_check_branch
      %32 = sbr.rel (0) target = $region37
    $region36: #{tpu_custom_call.1} parent=1 // pred_region
      _
    $region37: #{tpu_custom_call.1} parent=1 // pred_fallthru
      _
    %v33 = vld [vmem:[%s0] sm:$0xff]
    %v34 = vadd.f32 %v33, 1e-12
    %v35 = vlog2.pop %v34
    %v36 = vmul.f32 %v35, 0.6931472
    %v37 = vsub.f32 1.0, %v33
    %v38 = vadd.f32 %v37, 1e-12
    %v39 = vlog2.pop %v38
    %v40 = vmul.f32 %v39, 0.6931472
    %v41 = vld [vmem:[%s1] sm:$0xff]
    %v42 = vld [vmem:[%s1 + $0x8] sm:$0xff]
    %v43 = vld [vmem:[%s1 + $0x10] sm:$0xff]
    %v44 = vld [vmem:[%s1 + $0x18] sm:$0xff]
    %v45 = vld [vmem:[%s2] sm:$0xff]
    %v46 = vld [vmem:[%s2 + $0x8] sm:$0xff]
    %v47 = vld [vmem:[%s2 + $0x10] sm:$0xff]
    %v48 = vld [vmem:[%s2 + $0x18] sm:$0xff]
    %50 = vset.pattern.permute.xlu0 0
    %51 = vperm.xlu0 %50, %v45
    %v52 = vpop.permute.xlu0 %51
    %55 = vset.pattern.permute.xlu0 0
    %56 = vperm.xlu0 %55, %v46
    %v57 = vpop.permute.xlu0 %56
    %60 = vset.pattern.permute.xlu0 0
    %61 = vperm.xlu0 %60, %v47
    %v62 = vpop.permute.xlu0 %61
    %65 = vset.pattern.permute.xlu0 0
    %66 = vperm.xlu0 %65, %v48
    %v67 = vpop.permute.xlu0 %66
    %vm69 = vcmask 195584
    %v71 = vsel %vm69, %v41, 0
    %v74 = vsel %vm69, %v42, 0
    %v77 = vsel %vm69, %v43, 0
    %v80 = vsel %vm69, %v44, 0
    %82 = vmatpush.msra.mxu0 0.0
    %83 = vmatpush.msra.mxu0 0.0
    %84 = vmatpush.msra.mxu0 0.0
    %85 = vmatpush.msra.mxu0 0.0
    %86 = vmatpush.msra.mxu0 0.0
    %87 = vmatpush.msra.mxu0 0.0
    %88 = vmatpush.msra.mxu0 0.0
    %89 = vmatpush.msra.mxu0 0.0
    %90 = vmatpush.msra.mxu0 0.0
    %91 = vmatpush.msra.mxu0 0.0
    %92 = vmatpush.msra.mxu0 0.0
    %93 = vmatpush.msra.mxu0 0.0
    %94 = vmatpush.msra.mxu0 0.0
    %95 = vmatpush.msra.mxu0 %v40
    %96 = vmatpush.msra.mxu0 %v36
    %97 = vmatpush.msra.mxu0 %v33
    %98 = vmatmul.f32.gmra.mxu0 %v71
    %v99 = vpop.f32.mrf.mxu0
    %v100 = vadd.f32 %v52, %v99
    %101 = vmatmul.f32.gmra.mxu0 %v74
    %v102 = vpop.f32.mrf.mxu0
    %v103 = vadd.f32 %v57, %v102
    %104 = vmatmul.f32.gmra.mxu0 %v77
    %v105 = vpop.f32.mrf.mxu0
    %v106 = vadd.f32 %v62, %v105
    %107 = vmatmul.f32.gmra.mxu0 %v80
    %v108 = vpop.f32.mrf.mxu0
    %v109 = vadd.f32 %v67, %v108
    %110 = vdwg.mxu0
    %v111 = vmax.f32 %v100, 0.0
    %v112 = vmax.f32 %v103, 0.0
    %v113 = vmax.f32 %v106, 0.0
    %v114 = vmax.f32 %v109, 0.0
    %v115 = vld [vmem:[%s3] sm:$0xff]
    %v116 = vld [vmem:[%s3 + $0x8] sm:$0xff]
    %v117 = vld [vmem:[%s3 + $0x10] sm:$0xff]
    %v118 = vld [vmem:[%s3 + $0x18] sm:$0xff]
    %v119 = vld [vmem:[%s4] sm:$0xff]
    %v120 = vld [vmem:[%s4 + $0x8] sm:$0xff]
    %v121 = vld [vmem:[%s4 + $0x10] sm:$0xff]
    %v122 = vld [vmem:[%s4 + $0x18] sm:$0xff]
    %124 = vset.pattern.permute.xlu0 0
    %125 = vperm.xlu0 %124, %v119
    %v126 = vpop.permute.xlu0 %125
    %129 = vset.pattern.permute.xlu0 0
    %130 = vperm.xlu0 %129, %v120
    %v131 = vpop.permute.xlu0 %130
    %134 = vset.pattern.permute.xlu0 0
    %135 = vperm.xlu0 %134, %v121
    %v136 = vpop.permute.xlu0 %135
    %139 = vset.pattern.permute.xlu0 0
    %140 = vperm.xlu0 %139, %v122
    %v141 = vpop.permute.xlu0 %140
    %vm143 = vcmask 261120
    %v145 = vsel %vm143, %v115, 0
    %v148 = vsel %vm143, %v116, 0
    %v151 = vsel %vm143, %v117, 0
    %v154 = vsel %vm143, %v118, 0
    %156 = vmatpush.msra.mxu0 0.0
    %157 = vmatpush.msra.mxu0 0.0
    %158 = vmatpush.msra.mxu0 0.0
    %159 = vmatpush.msra.mxu0 0.0
    %160 = vmatpush.msra.mxu0 0.0
    %161 = vmatpush.msra.mxu0 0.0
    %162 = vmatpush.msra.mxu0 0.0
    %163 = vmatpush.msra.mxu0 0.0
    %164 = vmatpush.msra.mxu0 0.0
    %165 = vmatpush.msra.mxu0 0.0
    %166 = vmatpush.msra.mxu0 0.0
    %167 = vmatpush.msra.mxu0 0.0
    %168 = vmatpush.msra.mxu0 %v114
    %169 = vmatpush.msra.mxu0 %v113
    %170 = vmatpush.msra.mxu0 %v112
    %171 = vmatpush.msra.mxu0 %v111
    %172 = vmatmul.f32.gmra.mxu0 %v145
    %v173 = vpop.f32.mrf.mxu0
    %v174 = vadd.f32 %v126, %v173
    %175 = vmatmul.f32.gmra.mxu0 %v148
    %v176 = vpop.f32.mrf.mxu0
    %v177 = vadd.f32 %v131, %v176
    %178 = vmatmul.f32.gmra.mxu0 %v151
    %v179 = vpop.f32.mrf.mxu0
    %v180 = vadd.f32 %v136, %v179
    %181 = vmatmul.f32.gmra.mxu0 %v154
    %v182 = vpop.f32.mrf.mxu0
    %v183 = vadd.f32 %v141, %v182
    %184 = vdwg.mxu0
    %v185 = vmax.f32 %v174, 0.0
    %v186 = vmax.f32 %v177, 0.0
    %v187 = vmax.f32 %v180, 0.0
    %v188 = vmax.f32 %v183, 0.0
    %v189 = vld [vmem:[%s5] sm:$0xff]
    %v190 = vld [vmem:[%s5 + $0x8] sm:$0xff]
    %v191 = vld [vmem:[%s5 + $0x10] sm:$0xff]
    %v192 = vld [vmem:[%s5 + $0x18] sm:$0xff]
    %v193 = vld [vmem:[%s6] sm:$0xff]
    %v194 = vld [vmem:[%s6 + $0x8] sm:$0xff]
    %v195 = vld [vmem:[%s6 + $0x10] sm:$0xff]
    %v196 = vld [vmem:[%s6 + $0x18] sm:$0xff]
    %198 = vset.pattern.permute.xlu0 0
    %199 = vperm.xlu0 %198, %v193
    %v200 = vpop.permute.xlu0 %199
    %203 = vset.pattern.permute.xlu0 0
    %204 = vperm.xlu0 %203, %v194
    %v205 = vpop.permute.xlu0 %204
    %208 = vset.pattern.permute.xlu0 0
    %209 = vperm.xlu0 %208, %v195
    %v210 = vpop.permute.xlu0 %209
    %213 = vset.pattern.permute.xlu0 0
    %214 = vperm.xlu0 %213, %v196
    %v215 = vpop.permute.xlu0 %214
    %v218 = vsel %vm143, %v189, 0
    %v221 = vsel %vm143, %v190, 0
    %v224 = vsel %vm143, %v191, 0
    %v227 = vsel %vm143, %v192, 0
    %229 = vmatpush.msra.mxu0 0.0
    %230 = vmatpush.msra.mxu0 0.0
    %231 = vmatpush.msra.mxu0 0.0
    %232 = vmatpush.msra.mxu0 0.0
    %233 = vmatpush.msra.mxu0 0.0
    %234 = vmatpush.msra.mxu0 0.0
    %235 = vmatpush.msra.mxu0 0.0
    %236 = vmatpush.msra.mxu0 0.0
    %237 = vmatpush.msra.mxu0 0.0
    %238 = vmatpush.msra.mxu0 0.0
    %239 = vmatpush.msra.mxu0 0.0
    %240 = vmatpush.msra.mxu0 0.0
    %241 = vmatpush.msra.mxu0 %v188
    %242 = vmatpush.msra.mxu0 %v187
    %243 = vmatpush.msra.mxu0 %v186
    %244 = vmatpush.msra.mxu0 %v185
    %245 = vmatmul.f32.gmra.mxu0 %v218
    %v246 = vpop.f32.mrf.mxu0
    %v247 = vadd.f32 %v200, %v246
    %248 = vmatmul.f32.gmra.mxu0 %v221
    %v249 = vpop.f32.mrf.mxu0
    %v250 = vadd.f32 %v205, %v249
    %251 = vmatmul.f32.gmra.mxu0 %v224
    %v252 = vpop.f32.mrf.mxu0
    %v253 = vadd.f32 %v210, %v252
    %254 = vmatmul.f32.gmra.mxu0 %v227
    %v255 = vpop.f32.mrf.mxu0
    %v256 = vadd.f32 %v215, %v255
    %257 = vdwg.mxu0
    %v258 = vmax.f32 %v247, 0.0
    %v259 = vmax.f32 %v250, 0.0
    %v260 = vmax.f32 %v253, 0.0
    %v261 = vmax.f32 %v256, 0.0
    %v262 = vld [vmem:[%s7] sm:$0xff]
    %v263 = vld [vmem:[%s7 + $0x8] sm:$0xff]
    %v264 = vld [vmem:[%s8] sm:$0xff]
    %v265 = vld [vmem:[%s8 + $0x8] sm:$0xff]
    %267 = vset.pattern.permute.xlu0 0
    %268 = vperm.xlu0 %267, %v264
    %v269 = vpop.permute.xlu0 %268
    %272 = vset.pattern.permute.xlu0 0
    %273 = vperm.xlu0 %272, %v265
    %v274 = vpop.permute.xlu0 %273
    %v277 = vsel %vm143, %v262, 0
    %v280 = vsel %vm143, %v263, 0
    %282 = vmatpush.msra.mxu0 0.0
    %283 = vmatpush.msra.mxu0 0.0
    %284 = vmatpush.msra.mxu0 0.0
    %285 = vmatpush.msra.mxu0 0.0
    %286 = vmatpush.msra.mxu0 0.0
    %287 = vmatpush.msra.mxu0 0.0
    %288 = vmatpush.msra.mxu0 0.0
    %289 = vmatpush.msra.mxu0 0.0
    %290 = vmatpush.msra.mxu0 0.0
    %291 = vmatpush.msra.mxu0 0.0
    %292 = vmatpush.msra.mxu0 0.0
    %293 = vmatpush.msra.mxu0 0.0
    %294 = vmatpush.msra.mxu0 %v261
    %295 = vmatpush.msra.mxu0 %v260
    %296 = vmatpush.msra.mxu0 %v259
    %297 = vmatpush.msra.mxu0 %v258
    %298 = vmatmul.f32.gmra.mxu0 %v277
    %v299 = vpop.f32.mrf.mxu0
    %v300 = vadd.f32 %v269, %v299
    %301 = vmatmul.f32.gmra.mxu0 %v280
    %v302 = vpop.f32.mrf.mxu0
    %v303 = vadd.f32 %v274, %v302
    %304 = vdwg.mxu0
    %305 = vst [vmem:[#allocation2] sm:$0xff] %v300
    %306 = vst [vmem:[#allocation2 + $0x8] sm:$0xff] %v303
    // Predicated region
    $region38: #{tpu_custom_call.1} parent=1 // pred_check
      _
    $region39: #{tpu_custom_call.1} parent=1 // pred_check_branch
      %308 = sbr.rel (0) target = $region41
    $region40: #{tpu_custom_call.1} parent=1 // pred_region
      %310 = vsyncadd [#allocation3], 0
      %s311 = sshll.u32 [#allocation2], 4
      %s312 = int_to_ptr.vmem [resolvable:$true] %s311
      %s313 = sshll.u32 %s9, 4
      %s314 = int_to_ptr.hbm [resolvable:$true] %s313
      %319 = dma.vmem_to_hbm [thread:$0]  %s312, 256, %s314, [#allocation3], 128, 128, 8
    $region41: #{tpu_custom_call.1} parent=1 // pred_fallthru
      _
    // Predicated region
    $region42: #{tpu_custom_call.1} parent=1 // pred_check
      _
    $region43: #{tpu_custom_call.1} parent=1 // pred_check_branch
      %321 = sbr.rel (0) target = $region45
    $region44: #{tpu_custom_call.1} parent=1 // pred_region
      %323 = dma.done [#allocation3], 256
    $region45: #{tpu_custom_call.1} parent=1 // pred_fallthru
      _
    %324 = vsyncpa [#allocation3], 1

</llo_original>
